<compile_context>
chip_gen: v7x
topology: tpu7x:2x2x1
jax: 0.10.0
libtpu: 0.0.40
codegen_flags: <defaults>
</compile_context>

<pallas_src>
import jax
import jax.numpy as jnp
from jax.experimental import pallas as pl
from jax.experimental.pallas import tpu as pltpu

BN_EPS = 1e-5
LANE = 128
MAX_TB = 2048  # batch tile (rows per grid step); ~4 MiB live f32 intermediates


def _round_up(v, m):
    return ((v + m - 1) // m) * m


def _mlp_kernel(x_ref, w1_ref, b1_ref, w2_ref, b2_ref, w3_ref, b3_ref, o_ref):
    # fc1 (+ folded bn1) + relu     (dropout = identity in eval)
    x = x_ref[...].astype(jnp.bfloat16)              # in-kernel cast (VPU, free)
    h = jnp.dot(x, w1_ref[...], preferred_element_type=jnp.float32)
    h = jnp.maximum(h + b1_ref[...], 0.0)

    # fc2 (+ folded bn2) + relu     (dropout = identity in eval)
    h = jnp.dot(h.astype(jnp.bfloat16), w2_ref[...],
                preferred_element_type=jnp.float32)
    h = jnp.maximum(h + b2_ref[...], 0.0)

    # fc3 + sigmoid; matmul over 128-padded N, then narrow to num_classes for
    # the bias/sigmoid/store (HBM writeback only touches the real classes).
    logits = jnp.dot(h.astype(jnp.bfloat16), w3_ref[...],
                     preferred_element_type=jnp.float32)
    nc = o_ref.shape[1]
    o_ref[...] = jax.nn.sigmoid(logits[:, :nc] + b3_ref[...]).astype(o_ref.dtype)


def prepare_params(params):
    """Fold BatchNorm (running stats) into the Linears, pad/ cast for the MXU.

    Call ONCE outside the jitted forward; the results are inference constants.
    """
    s1 = params["g1"] * jax.lax.rsqrt(params["rv1"] + BN_EPS)          # (1,256)
    w1 = params["w1"] * s1                                             # (in,256)
    b1 = (params["b1"] - params["rm1"]) * s1 + params["beta1"]         # (1,256)
    s2 = params["g2"] * jax.lax.rsqrt(params["rv2"] + BN_EPS)
    w2 = params["w2"] * s2
    b2 = (params["b2"] - params["rm2"]) * s2 + params["beta2"]

    num_classes = params["w3"].shape[1]
    n_pad = _round_up(num_classes, LANE)                 # MXU-friendly N for fc3
    w3 = jnp.zeros((params["w3"].shape[0], n_pad), jnp.float32)
    w3 = w3.at[:, :num_classes].set(params["w3"])

    return dict(
        w1=w1.astype(jnp.bfloat16), b1=b1,
        w2=w2.astype(jnp.bfloat16), b2=b2,
        w3=w3.astype(jnp.bfloat16), b3=params["b3"],     # b3 stays narrow f32
    )


@jax.jit
def transaction_classifier_forward(x, prep):
    """x: (B, input_size) float32; prep: output of prepare_params()."""
    B, in_f = x.shape
    num_classes = prep["b3"].shape[1]
    n_pad = prep["w3"].shape[1]
    h1, h2 = prep["w1"].shape[1], prep["w2"].shape[1]

    # ---- batch tiling: >=2 grid steps when B>16 (v7x megacore), big tiles ----
    b16 = _round_up(B, 16)
    n_steps = 1 if b16 <= 16 else max(2, pl.cdiv(b16, MAX_TB))
    TB = _round_up(pl.cdiv(b16, n_steps), 16)
    b_total = n_steps * TB

    xp = x if b_total == B else jnp.zeros((b_total, in_f), x.dtype).at[:B].set(x)

    const = lambda i: (0, 0)
    flops = 2 * b_total * (in_f * h1 + h1 * h2 + h2 * n_pad)
    bytes_accessed = (xp.size * 4                                     # x (f32)
                      + (prep["w1"].size + prep["w2"].size + prep["w3"].size) * 2
                      + (prep["b1"].size + prep["b2"].size + prep["b3"].size) * 4
                      + b_total * num_classes * 4)                    # narrow out

    out = pl.pallas_call(
        _mlp_kernel,
        out_shape=jax.ShapeDtypeStruct((b_total, num_classes), jnp.float32),
        grid=(n_steps,),
        in_specs=[
            pl.BlockSpec((TB, in_f), lambda i: (i, 0)),   # x: tiled over batch
            pl.BlockSpec(prep["w1"].shape, const),        # weights/biases resident
            pl.BlockSpec(prep["b1"].shape, const),
            pl.BlockSpec(prep["w2"].shape, const),
            pl.BlockSpec(prep["b2"].shape, const),
            pl.BlockSpec(prep["w3"].shape, const),
            pl.BlockSpec(prep["b3"].shape, const),
        ],
        out_specs=pl.BlockSpec((TB, num_classes), lambda i: (i, 0)),
        compiler_params=pltpu.CompilerParams(
            dimension_semantics=("parallel",)),
        cost_estimate=pl.CostEstimate(
            flops=flops,
            transcendentals=b_total * num_classes,        # sigmoid
            bytes_accessed=bytes_accessed),
    )(xp, prep["w1"], prep["b1"], prep["w2"], prep["b2"], prep["w3"], prep["b3"])

    return out[:B]


def init_params(key, input_size, num_classes):
    """Deterministic init matching the PyTorch module's shapes.

    PyTorch Linear stores weight as (out, in); we store the transpose (in, out)
    so the kernel computes x @ W directly. Vectors are kept 2D (1, F) for TPU.
    """
    k = jax.random.split(key, 6)

    def linear(kw, kb, fan_in, fan_out):
        bound = 1.0 / (fan_in ** 0.5)
        w = jax.random.uniform(kw, (fan_in, fan_out), jnp.float32, -bound, bound)
        b = jax.random.uniform(kb, (1, fan_out), jnp.float32, -bound, bound)
        return w, b

    w1, b1 = linear(k[0], k[1], input_size, 256)
    w2, b2 = linear(k[2], k[3], 256, 128)
    w3, b3 = linear(k[4], k[5], 128, num_classes)

    def bn(f):
        # PyTorch defaults: gamma=1, beta=0, running_mean=0, running_var=1
        return (
            jnp.ones((1, f), jnp.float32),    # gamma
            jnp.zeros((1, f), jnp.float32),   # beta
            jnp.zeros((1, f), jnp.float32),   # running_mean
            jnp.ones((1, f), jnp.float32),    # running_var
        )

    g1, beta1, rm1, rv1 = bn(256)
    g2, beta2, rm2, rv2 = bn(128)

    return dict(
        w1=w1, b1=b1, g1=g1, beta1=beta1, rm1=rm1, rv1=rv1,
        w2=w2, b2=b2, g2=g2, beta2=beta2, rm2=rm2, rv2=rv2,
        w3=w3, b3=b3,
    )


def _reference_forward(x, params):
    """Pure-JAX f32 reference (PyTorch eval semantics) for a tolerance check."""
    s1 = params["g1"] * jax.lax.rsqrt(params["rv1"] + BN_EPS)
    h = x @ params["w1"] + params["b1"]
    h = jnp.maximum((h - params["rm1"]) * s1 + params["beta1"], 0.0)
    s2 = params["g2"] * jax.lax.rsqrt(params["rv2"] + BN_EPS)
    h = h @ params["w2"] + params["b2"]
    h = jnp.maximum((h - params["rm2"]) * s2 + params["beta2"], 0.0)
    return jax.nn.sigmoid(h @ params["w3"] + params["b3"])


if __name__ == "__main__":
    key = jax.random.PRNGKey(0)
    k_x, k_p = jax.random.split(key)

    batch = 2
    input_size = 32
    num_classes = 8

    x = jax.random.normal(k_x, (batch, input_size), dtype=jnp.float32)
    params = init_params(k_p, input_size, num_classes)

    prep = prepare_params(params)          # constants: fold/pad/cast once
    out = transaction_classifier_forward(x, prep)
    out = jax.block_until_ready(out)

    ref = _reference_forward(x, params)

    assert out.shape == (batch, num_classes)
    assert bool(jnp.all((out >= 0.0) & (out <= 1.0)))
    assert bool(jnp.max(jnp.abs(out - ref)) < 5e-2)  # bf16 matmul tolerance
    print("KERNEL_OK")
</pallas_src>

<mosaic_0001>
module attributes {stable_mosaic.version = 11 : i64} {
  func.func @_mlp_kernel(%arg0: i32, %arg1: memref<16x32xf32, #tpu.memory_space<vmem>>, %arg2: memref<32x256xbf16, #tpu.memory_space<vmem>>, %arg3: memref<1x256xf32, #tpu.memory_space<vmem>>, %arg4: memref<256x128xbf16, #tpu.memory_space<vmem>>, %arg5: memref<1x128xf32, #tpu.memory_space<vmem>>, %arg6: memref<128x128xbf16, #tpu.memory_space<vmem>>, %arg7: memref<1x8xf32, #tpu.memory_space<vmem>>, %arg8: memref<16x8xf32, #tpu.memory_space<vmem>>) attributes {dimension_semantics = [#tpu.dimension_semantics<parallel>], iteration_bounds = array<i64: 1>, scalar_prefetch = 0 : i64, scratch_operands = 0 : i64, tpu.core_type = #tpu.core_type<tc>, window_params = [{transform_indices = @transform_0, window_bounds = array<i64: 16, 32>}, {pipeline_mode = #tpu.pipeline_mode<synchronous>, transform_indices = @transform_1, window_bounds = array<i64: 32, 256>}, {pipeline_mode = #tpu.pipeline_mode<synchronous>, transform_indices = @transform_2, window_bounds = array<i64: 1, 256>}, {pipeline_mode = #tpu.pipeline_mode<synchronous>, transform_indices = @transform_3, window_bounds = array<i64: 256, 128>}, {pipeline_mode = #tpu.pipeline_mode<synchronous>, transform_indices = @transform_4, window_bounds = array<i64: 1, 128>}, {pipeline_mode = #tpu.pipeline_mode<synchronous>, transform_indices = @transform_5, window_bounds = array<i64: 128, 128>}, {pipeline_mode = #tpu.pipeline_mode<synchronous>, transform_indices = @transform_6, window_bounds = array<i64: 1, 8>}, {transform_indices = @transform_7, window_bounds = array<i64: 16, 8>}]} {
    %c0 = arith.constant 0 : index
    %c0_0 = arith.constant 0 : index
    %0 = vector.load %arg1[%c0, %c0_0] : memref<16x32xf32, #tpu.memory_space<vmem>>, vector<16x32xf32>
    %1 = arith.truncf %0 : vector<16x32xf32> to vector<16x32xbf16>
    %c0_1 = arith.constant 0 : index
    %c0_2 = arith.constant 0 : index
    %2 = vector.load %arg2[%c0_1, %c0_2] : memref<32x256xbf16, #tpu.memory_space<vmem>>, vector<32x256xbf16>
    %cst = arith.constant dense<0.000000e+00> : vector<16x256xf32>
    %3 = tpu.matmul %1, %2, %cst {dimension_numbers = #tpu.dot_dimension_numbers<[1], [0], [0], [1], [0, 0, 1, 1], [], []>} : vector<16x32xbf16>, vector<32x256xbf16>, vector<16x256xf32> -> vector<16x256xf32>
    %c0_3 = arith.constant 0 : index
    %c0_4 = arith.constant 0 : index
    %4 = vector.load %arg3[%c0_3, %c0_4] : memref<1x256xf32, #tpu.memory_space<vmem>>, vector<1x256xf32>
    %5 = vector.broadcast %4 : vector<1x256xf32> to vector<16x256xf32>
    %6 = arith.addf %3, %5 : vector<16x256xf32>
    %cst_5 = arith.constant 0.000000e+00 : f32
    %7 = vector.broadcast %cst_5 : f32 to vector<16x256xf32>
    %8 = arith.maximumf %6, %7 : vector<16x256xf32>
    %9 = arith.truncf %8 : vector<16x256xf32> to vector<16x256xbf16>
    %c0_6 = arith.constant 0 : index
    %c0_7 = arith.constant 0 : index
    %10 = vector.load %arg4[%c0_6, %c0_7] : memref<256x128xbf16, #tpu.memory_space<vmem>>, vector<256x128xbf16>
    %cst_8 = arith.constant dense<0.000000e+00> : vector<16x128xf32>
    %11 = tpu.matmul %9, %10, %cst_8 {dimension_numbers = #tpu.dot_dimension_numbers<[1], [0], [0], [1], [0, 0, 1, 1], [], []>} : vector<16x256xbf16>, vector<256x128xbf16>, vector<16x128xf32> -> vector<16x128xf32>
    %c0_9 = arith.constant 0 : index
    %c0_10 = arith.constant 0 : index
    %12 = vector.load %arg5[%c0_9, %c0_10] : memref<1x128xf32, #tpu.memory_space<vmem>>, vector<1x128xf32>
    %13 = vector.broadcast %12 : vector<1x128xf32> to vector<16x128xf32>
    %14 = arith.addf %11, %13 : vector<16x128xf32>
    %cst_11 = arith.constant 0.000000e+00 : f32
    %15 = vector.broadcast %cst_11 : f32 to vector<16x128xf32>
    %16 = arith.maximumf %14, %15 : vector<16x128xf32>
    %17 = arith.truncf %16 : vector<16x128xf32> to vector<16x128xbf16>
    %c0_12 = arith.constant 0 : index
    %c0_13 = arith.constant 0 : index
    %18 = vector.load %arg6[%c0_12, %c0_13] : memref<128x128xbf16, #tpu.memory_space<vmem>>, vector<128x128xbf16>
    %cst_14 = arith.constant dense<0.000000e+00> : vector<16x128xf32>
    %19 = tpu.matmul %17, %18, %cst_14 {dimension_numbers = #tpu.dot_dimension_numbers<[1], [0], [0], [1], [0, 0, 1, 1], [], []>} : vector<16x128xbf16>, vector<128x128xbf16>, vector<16x128xf32> -> vector<16x128xf32>
    %20 = vector.extract_strided_slice %19 {offsets = [0, 0], sizes = [16, 8], strides = [1, 1]} : vector<16x128xf32> to vector<16x8xf32>
    %c0_15 = arith.constant 0 : index
    %c0_16 = arith.constant 0 : index
    %21 = vector.load %arg7[%c0_15, %c0_16] : memref<1x8xf32, #tpu.memory_space<vmem>>, vector<1x8xf32>
    %22 = vector.broadcast %21 : vector<1x8xf32> to vector<16x8xf32>
    %23 = arith.addf %20, %22 : vector<16x8xf32>
    %24 = arith.negf %23 : vector<16x8xf32>
    %25 = math.exp %24 : vector<16x8xf32>
    %cst_17 = arith.constant 1.000000e+00 : f32
    %26 = vector.broadcast %cst_17 : f32 to vector<16x8xf32>
    %27 = arith.addf %26, %25 : vector<16x8xf32>
    %28 = arith.divf %26, %27 : vector<16x8xf32>
    %c0_18 = arith.constant 0 : index
    %c0_19 = arith.constant 0 : index
    %29 = vector.load %arg8[%c0_18, %c0_19] : memref<16x8xf32, #tpu.memory_space<vmem>>, vector<16x8xf32>
    tpu.vector_store %arg8[%c0_18, %c0_19], %28 {strides = array<i32>} : memref<16x8xf32, #tpu.memory_space<vmem>>, vector<16x8xf32>,
    return
  }
  func.func @transform_0(%arg0: i32) -> (i32, i32) {
    %c0_i32 = arith.constant 0 : i32
    %c0_i32_0 = arith.constant 0 : i32
    return %arg0, %c0_i32 : i32, i32
  }
  func.func @transform_1(%arg0: i32) -> (i32, i32) {
    %c0_i32 = arith.constant 0 : i32
    %c0_i32_0 = arith.constant 0 : i32
    %c0_i32_1 = arith.constant 0 : i32
    return %c0_i32, %c0_i32_0 : i32, i32
  }
  func.func @transform_2(%arg0: i32) -> (i32, i32) {
    %c0_i32 = arith.constant 0 : i32
    %c0_i32_0 = arith.constant 0 : i32
    %c0_i32_1 = arith.constant 0 : i32
    return %c0_i32, %c0_i32_0 : i32, i32
  }
  func.func @transform_3(%arg0: i32) -> (i32, i32) {
    %c0_i32 = arith.constant 0 : i32
    %c0_i32_0 = arith.constant 0 : i32
    %c0_i32_1 = arith.constant 0 : i32
    return %c0_i32, %c0_i32_0 : i32, i32
  }
  func.func @transform_4(%arg0: i32) -> (i32, i32) {
    %c0_i32 = arith.constant 0 : i32
    %c0_i32_0 = arith.constant 0 : i32
    %c0_i32_1 = arith.constant 0 : i32
    return %c0_i32, %c0_i32_0 : i32, i32
  }
  func.func @transform_5(%arg0: i32) -> (i32, i32) {
    %c0_i32 = arith.constant 0 : i32
    %c0_i32_0 = arith.constant 0 : i32
    %c0_i32_1 = arith.constant 0 : i32
    return %c0_i32, %c0_i32_0 : i32, i32
  }
  func.func @transform_6(%arg0: i32) -> (i32, i32) {
    %c0_i32 = arith.constant 0 : i32
    %c0_i32_0 = arith.constant 0 : i32
    %c0_i32_1 = arith.constant 0 : i32
    return %c0_i32, %c0_i32_0 : i32, i32
  }
  func.func @transform_7(%arg0: i32) -> (i32, i32) {
    %c0_i32 = arith.constant 0 : i32
    %c0_i32_0 = arith.constant 0 : i32
    return %arg0, %c0_i32 : i32, i32
  }
}

</mosaic_0001>

<llo_original>
// kernel: transaction_classifier_forward.1
$region0: #{transaction_classifier_forward.1}
  #allocation0 [shape = 'u32[]', space=smem, size = 0x4, offset = 0x4, fixed_abs, tag = 'smem constant byte address 0x4 - core index']
  #allocation1 [shape = 'u32[144,128]{1,0:T(1,128)}', space=vmem, size = 0x12000, scoped, tag = 'internal scratch']
  %s0 = inlined_call_operand.vmem [shape: f32[16,32], index: 0, kind: input, shape index: {}]
  %s1 = inlined_call_operand.vmem [shape: bf16[32,256], index: 1, kind: input, shape index: {}]
  %s2 = inlined_call_operand.vmem [shape: f32[1,256], index: 2, kind: input, shape index: {}]
  %s3 = inlined_call_operand.hbm [shape: bf16[256,128], index: 3, kind: input, shape index: {}]
  %s4 = inlined_call_operand.hbm [shape: f32[1,128], index: 4, kind: input, shape index: {}]
  %s5 = inlined_call_operand.hbm [shape: bf16[128,128], index: 5, kind: input, shape index: {}]
  %s6 = inlined_call_operand.hbm [shape: f32[1,8], index: 6, kind: input, shape index: {}]
  %s7 = inlined_call_operand.vmem [shape: f32[16,8], index: 7, kind: output, shape index: {}]
  %s8 = sld [smem:[#allocation0]]
  $region54: #{transaction_classifier_forward.1} parent=0
    _
  %s10 = ssub.s32 1, %s8
  %s11 = scalar_select 0, %s10, %s8
  $region1: #{transaction_classifier_forward.1} parent=0
    #allocation2 [shape = 'u8[65536]{0}', space=vmem, size = 0x10000, scoped, tag = 'input window, operand 3, single buffered']
    #allocation3 [shape = 's32[1]{0}', space=sflag, size = 0x4, scoped, tag = 'scoped memory for transaction_classifier_forward.1']
    #allocation4 [shape = 'u8[512]{0}', space=vmem, size = 0x400, scoped, tag = 'input window, operand 4, single buffered']
    #allocation5 [shape = 's32[1]{0}', space=sflag, size = 0x4, scoped, tag = 'scoped memory for transaction_classifier_forward.1']
    #allocation6 [shape = 'u8[32768]{0}', space=vmem, size = 0x8000, scoped, tag = 'input window, operand 5, single buffered']
    #allocation7 [shape = 'u8[512]{0}', space=vmem, size = 0x400, scoped, tag = 'input window, operand 6, single buffered']
    #allocation8 [shape = 's32[1]{0}', space=sflag, size = 0x4, scoped, tag = 'scoped memory for transaction_classifier_forward.1']
    %12 = vsyncpa [#allocation3], 0
    %13 = vsyncpa [#allocation5], 0
    %14 = vsyncpa [#allocation8], 0
    // Predicated region
    $region2: #{transaction_classifier_forward.1} parent=1 // pred_check
      _
    $region3: #{transaction_classifier_forward.1} parent=1 // pred_check_branch
      %16 = sbr.rel (0) target = $region5
    $region4: #{transaction_classifier_forward.1} parent=1 // pred_region
      _
    $region5: #{transaction_classifier_forward.1} parent=1 // pred_fallthru
      _
    // Predicated region
    $region6: #{transaction_classifier_forward.1} parent=1 // pred_check
      _
    $region7: #{transaction_classifier_forward.1} parent=1 // pred_check_branch
      %18 = sbr.rel (0) target = $region9
    $region8: #{transaction_classifier_forward.1} parent=1 // pred_region
      _
    $region9: #{transaction_classifier_forward.1} parent=1 // pred_fallthru
      _
    // Predicated region
    $region10: #{transaction_classifier_forward.1} parent=1 // pred_check
      _
    $region11: #{transaction_classifier_forward.1} parent=1 // pred_check_branch
      %20 = sbr.rel (0) target = $region13
    $region12: #{transaction_classifier_forward.1} parent=1 // pred_region
      _
    $region13: #{transaction_classifier_forward.1} parent=1 // pred_fallthru
      _
    // Predicated region
    $region14: #{transaction_classifier_forward.1} parent=1 // pred_check
      _
    $region15: #{transaction_classifier_forward.1} parent=1 // pred_check_branch
      %22 = sbr.rel (0) target = $region17
    $region16: #{transaction_classifier_forward.1} parent=1 // pred_region
      %s24 = ssub.s32 2048, 2048
      %25 = vsyncadd [#allocation3], %s24
      %s26 = sshll.u32 [#allocation2], 4
      %s27 = int_to_ptr.vmem [resolvable:$true] %s26
      %32 = dma.hbm_to_vmem [thread:$0]  %s3, 2048, %s27, [#allocation3], 64, 64, 4
    $region17: #{transaction_classifier_forward.1} parent=1 // pred_fallthru
      _
    // Predicated region
    $region18: #{transaction_classifier_forward.1} parent=1 // pred_check
      _
    $region19: #{transaction_classifier_forward.1} parent=1 // pred_check_branch
      %34 = sbr.rel (0) target = $region21
    $region20: #{transaction_classifier_forward.1} parent=1 // pred_region
      %s36 = ssub.s32 16, 16
      %37 = vsyncadd [#allocation5], %s36
      %s39 = sshll.u32 [#allocation4], 4
      %s40 = int_to_ptr.vmem [resolvable:$true] %s39
      %42 = dma.hbm_to_vmem [thread:$0]  %s4, 16, %s40, [#allocation5]
    $region21: #{transaction_classifier_forward.1} parent=1 // pred_fallthru
      _
    // Predicated region
    $region22: #{transaction_classifier_forward.1} parent=1 // pred_check
      _
    $region23: #{transaction_classifier_forward.1} parent=1 // pred_check_branch
      %44 = sbr.rel (0) target = $region25
    $region24: #{transaction_classifier_forward.1} parent=1 // pred_region
      %s46 = ssub.s32 1024, 1024
      %47 = vsyncadd [#allocation5], %s46
      %s48 = sshll.u32 [#allocation6], 4
      %s49 = int_to_ptr.vmem [resolvable:$true] %s48
      %54 = dma.hbm_to_vmem [thread:$0]  %s5, 1024, %s49, [#allocation5], 64, 64, 4
    $region25: #{transaction_classifier_forward.1} parent=1 // pred_fallthru
      _
    // Predicated region
    $region26: #{transaction_classifier_forward.1} parent=1 // pred_check
      _
    $region27: #{transaction_classifier_forward.1} parent=1 // pred_check_branch
      %56 = sbr.rel (0) target = $region29
    $region28: #{transaction_classifier_forward.1} parent=1 // pred_region
      %s58 = ssub.s32 16, 16
      %59 = vsyncadd [#allocation8], %s58
      %s61 = sshll.u32 [#allocation7], 4
      %s62 = int_to_ptr.vmem [resolvable:$true] %s61
      %64 = dma.hbm_to_vmem [thread:$0]  %s6, 16, %s62, [#allocation8]
    $region29: #{transaction_classifier_forward.1} parent=1 // pred_fallthru
      _
    // Predicated region
    $region30: #{transaction_classifier_forward.1} parent=1 // pred_check
      _
    $region31: #{transaction_classifier_forward.1} parent=1 // pred_check_branch
      %66 = sbr.rel (0) target = $region33
    $region32: #{transaction_classifier_forward.1} parent=1 // pred_region
      %67 = dma.done [#allocation3], 2048
    $region33: #{transaction_classifier_forward.1} parent=1 // pred_fallthru
      _
    // Predicated region
    $region34: #{transaction_classifier_forward.1} parent=1 // pred_check
      _
    $region35: #{transaction_classifier_forward.1} parent=1 // pred_check_branch
      %69 = sbr.rel (0) target = $region37
    $region36: #{transaction_classifier_forward.1} parent=1 // pred_region
      %70 = dma.done [#allocation5], 16
    $region37: #{transaction_classifier_forward.1} parent=1 // pred_fallthru
      _
    // Predicated region
    $region38: #{transaction_classifier_forward.1} parent=1 // pred_check
      _
    $region39: #{transaction_classifier_forward.1} parent=1 // pred_check_branch
      %72 = sbr.rel (0) target = $region41
    $region40: #{transaction_classifier_forward.1} parent=1 // pred_region
      %73 = dma.done [#allocation5], 1024
    $region41: #{transaction_classifier_forward.1} parent=1 // pred_fallthru
      _
    // Predicated region
    $region42: #{transaction_classifier_forward.1} parent=1 // pred_check
      _
    $region43: #{transaction_classifier_forward.1} parent=1 // pred_check_branch
      %75 = sbr.rel (0) target = $region45
    $region44: #{transaction_classifier_forward.1} parent=1 // pred_region
      %76 = dma.done [#allocation8], 16
    $region45: #{transaction_classifier_forward.1} parent=1 // pred_fallthru
      _
    %v78 = vld [vmem:[%s0] sm:$0xff]
    %v79 = vld [vmem:[%s0 + $0x8] sm:$0xff]
    %v80 = vpack.c.bf16 %v79, %v78
    %v81 = vld [vmem:[%s1] sm:$0xff]
    %v82 = vld [vmem:[%s1 + $0x8] sm:$0xff]
    %v83 = vld [vmem:[%s1 + $0x10] sm:$0xff]
    %v84 = vld [vmem:[%s1 + $0x18] sm:$0xff]
    %v85 = vld [vmem:[%s2] sm:$0x3]
    %v87 = vlaneseq
    %v88 = vshrl.u32 %v87, 7
    %v89 = vsub.s32 0, %v88
    %v90 = vrot.slane %v85, %v89
    %v91 = vlaneseq
    %v92 = vshrl.u32 %v91, 7
    %v93 = vsub.s32 1, %v92
    %v94 = vrot.slane %v85, %v93
    %v101 = vunpack.c.l.b16 %v81
    %v102 = vunpack.c.h.b16 %v81
    %v103 = vunpack.c.l.b16 %v82
    %v104 = vunpack.c.h.b16 %v82
    %v105 = vunpack.c.l.b16 %v83
    %v106 = vunpack.c.h.b16 %v83
    %v107 = vunpack.c.l.b16 %v84
    %v108 = vunpack.c.h.b16 %v84
    %v109 = vpack.c.b16 %v103, %v101
    %v110 = vpack.c.b16 %v104, %v102
    %v111 = vpack.c.b16 %v107, %v105
    %v112 = vpack.c.b16 %v108, %v106
    %vm117 = vcmask 261120
    %v119 = vsel %vm117, %v80, 0
    %121 = vmatprep.subr.bf16.mxu0 %v110
    %122 = vmatpush1.bf16.msra.mxu0 %v109
    %123 = vmatprep.subr.bf16.mxu0 %v112
    %124 = vmatpush1.bf16.msra.mxu0 %v111
    %125 = vmatprep.subr.bf16.mxu0 0
    %126 = vmatpush1.bf16.msra.mxu0 0
    %127 = vmatprep.subr.bf16.mxu0 0
    %128 = vmatpush1.bf16.msra.mxu0 0
    %129 = vmatprep.subr.bf16.mxu0 0
    %130 = vmatpush1.bf16.msra.mxu0 0
    %131 = vmatprep.subr.bf16.mxu0 0
    %132 = vmatpush1.bf16.msra.mxu0 0
    %133 = vmatprep.subr.bf16.mxu0 0
    %134 = vmatpush1.bf16.msra.mxu0 0
    %135 = vmatprep.subr.bf16.mxu0 0
    %136 = vmatpush1.bf16.msra.mxu0 0
    %137 = vmatprep.subr.bf16.mxu0 0
    %138 = vmatpush1.bf16.msra.mxu0 0
    %139 = vmatprep.subr.bf16.mxu0 0
    %140 = vmatpush1.bf16.msra.mxu0 0
    %141 = vmatprep.subr.bf16.mxu0 0
    %142 = vmatpush1.bf16.msra.mxu0 0
    %143 = vmatprep.subr.bf16.mxu0 0
    %144 = vmatpush1.bf16.msra.mxu0 0
    %145 = vmatprep.subr.bf16.mxu0 0
    %146 = vmatpush1.bf16.msra.mxu0 0
    %147 = vmatprep.subr.bf16.mxu0 0
    %148 = vmatpush1.bf16.msra.mxu0 0
    %149 = vmatprep.subr.bf16.mxu0 0
    %150 = vmatpush1.bf16.msra.mxu0 0
    %151 = vmatprep.subr.bf16.mxu0 0
    %152 = vmatpush1.bf16.msra.mxu0 0
    %153 = vmatprep.mubr.bf16.mxu0 0
    %154 = vmatmul.mubr.bf16.gmra.mrb[0].mxu0 %v119
    %v155 = vpop.f32.mrb[0].mxu0
    %v156 = vadd.f32 %v90, %v155
    %v157 = vpop.f32.mrb[0].mxu0
    %v158 = vadd.f32 %v94, %v157
    %v159 = vpop.f32.mrb[0].mxu0
    %v160 = vadd.f32 %v90, %v159
    %v161 = vpop.f32.mrb[0].mxu0
    %v162 = vadd.f32 %v94, %v161
    %163 = vdwg.mxu0
    %v164 = vmax.f32 %v156, 0.0
    %v165 = vmax.f32 %v158, 0.0
    %v166 = vmax.f32 %v160, 0.0
    %v167 = vmax.f32 %v162, 0.0
    %v168 = vpack.c.bf16 %v166, %v164
    %v169 = vpack.c.bf16 %v167, %v165
    %v170 = vld [vmem:[#allocation2] sm:$0xf]
    %v171 = vld [vmem:[#allocation2 + $0x4] sm:$0xf]
    %v172 = vld [vmem:[#allocation2 + $0x8] sm:$0xf]
    %v173 = vld [vmem:[#allocation2 + $0xc] sm:$0xf]
    %v174 = vld [vmem:[#allocation2 + $0x10] sm:$0xf]
    %v175 = vld [vmem:[#allocation2 + $0x14] sm:$0xf]
    %v176 = vld [vmem:[#allocation2 + $0x18] sm:$0xf]
    %v177 = vld [vmem:[#allocation2 + $0x1c] sm:$0xf]
    %v178 = vld [vmem:[#allocation2 + $0x20] sm:$0xf]
    %v179 = vld [vmem:[#allocation2 + $0x24] sm:$0xf]
    %v180 = vld [vmem:[#allocation2 + $0x28] sm:$0xf]
    %v181 = vld [vmem:[#allocation2 + $0x2c] sm:$0xf]
    %v182 = vld [vmem:[#allocation2 + $0x30] sm:$0xf]
    %v183 = vld [vmem:[#allocation2 + $0x34] sm:$0xf]
    %v184 = vld [vmem:[#allocation2 + $0x38] sm:$0xf]
    %v185 = vld [vmem:[#allocation2 + $0x3c] sm:$0xf]
    %v186 = vld [vmem:[#allocation2 + $0x40] sm:$0xf]
    %v187 = vld [vmem:[#allocation2 + $0x44] sm:$0xf]
    %v188 = vld [vmem:[#allocation2 + $0x48] sm:$0xf]
    %v189 = vld [vmem:[#allocation2 + $0x4c] sm:$0xf]
    %v190 = vld [vmem:[#allocation2 + $0x50] sm:$0xf]
    %v191 = vld [vmem:[#allocation2 + $0x54] sm:$0xf]
    %v192 = vld [vmem:[#allocation2 + $0x58] sm:$0xf]
    %v193 = vld [vmem:[#allocation2 + $0x5c] sm:$0xf]
    %v194 = vld [vmem:[#allocation2 + $0x60] sm:$0xf]
    %v195 = vld [vmem:[#allocation2 + $0x64] sm:$0xf]
    %v196 = vld [vmem:[#allocation2 + $0x68] sm:$0xf]
    %v197 = vld [vmem:[#allocation2 + $0x6c] sm:$0xf]
    %v198 = vld [vmem:[#allocation2 + $0x70] sm:$0xf]
    %v199 = vld [vmem:[#allocation2 + $0x74] sm:$0xf]
    %v200 = vld [vmem:[#allocation2 + $0x78] sm:$0xf]
    %v201 = vld [vmem:[#allocation2 + $0x7c] sm:$0xf]
    %v202 = vld [vmem:[#allocation4] sm:$0x1]
    %v204 = vlaneseq
    %v205 = vshrl.u32 %v204, 7
    %v206 = vsub.s32 0, %v205
    %v207 = vrot.slane %v202, %v206
    %v241 = vunpack.c.l.b16 %v170
    %v242 = vunpack.c.l.b16 %v171
    %v243 = vunpack.c.l.b16 %v172
    %v244 = vunpack.c.l.b16 %v173
    %v245 = vunpack.c.l.b16 %v174
    %v246 = vunpack.c.l.b16 %v175
    %v247 = vunpack.c.l.b16 %v176
    %v248 = vunpack.c.l.b16 %v177
    %v249 = vunpack.c.l.b16 %v178
    %v250 = vunpack.c.l.b16 %v179
    %v251 = vunpack.c.l.b16 %v180
    %v252 = vunpack.c.l.b16 %v181
    %v253 = vunpack.c.l.b16 %v182
    %v254 = vunpack.c.l.b16 %v183
    %v255 = vunpack.c.l.b16 %v184
    %v256 = vunpack.c.l.b16 %v185
    %v257 = vunpack.c.l.b16 %v186
    %v258 = vunpack.c.l.b16 %v187
    %v259 = vunpack.c.l.b16 %v188
    %v260 = vunpack.c.l.b16 %v189
    %v261 = vunpack.c.l.b16 %v190
    %v262 = vunpack.c.l.b16 %v191
    %v263 = vunpack.c.l.b16 %v192
    %v264 = vunpack.c.l.b16 %v193
    %v265 = vunpack.c.l.b16 %v194
    %v266 = vunpack.c.l.b16 %v195
    %v267 = vunpack.c.l.b16 %v196
    %v268 = vunpack.c.l.b16 %v197
    %v269 = vunpack.c.l.b16 %v198
    %v270 = vunpack.c.l.b16 %v199
    %v271 = vunpack.c.l.b16 %v200
    %v272 = vunpack.c.l.b16 %v201
    %v273 = vpack.c.b16 %v242, %v241
    %v274 = vpack.c.b16 %v244, %v243
    %v275 = vpack.c.b16 %v246, %v245
    %v276 = vpack.c.b16 %v248, %v247
    %v277 = vpack.c.b16 %v250, %v249
    %v278 = vpack.c.b16 %v252, %v251
    %v279 = vpack.c.b16 %v254, %v253
    %v280 = vpack.c.b16 %v256, %v255
    %v281 = vpack.c.b16 %v258, %v257
    %v282 = vpack.c.b16 %v260, %v259
    %v283 = vpack.c.b16 %v262, %v261
    %v284 = vpack.c.b16 %v264, %v263
    %v285 = vpack.c.b16 %v266, %v265
    %v286 = vpack.c.b16 %v268, %v267
    %v287 = vpack.c.b16 %v270, %v269
    %v288 = vpack.c.b16 %v272, %v271
    %305 = vmatprep.subr.bf16.mxu0 0
    %306 = vmatpush1.bf16.msra.mxu0 %v273
    %307 = vmatprep.subr.bf16.mxu0 0
    %308 = vmatpush1.bf16.msra.mxu0 %v274
    %309 = vmatprep.subr.bf16.mxu0 0
    %310 = vmatpush1.bf16.msra.mxu0 %v275
    %311 = vmatprep.subr.bf16.mxu0 0
    %312 = vmatpush1.bf16.msra.mxu0 %v276
    %313 = vmatprep.subr.bf16.mxu0 0
    %314 = vmatpush1.bf16.msra.mxu0 %v277
    %315 = vmatprep.subr.bf16.mxu0 0
    %316 = vmatpush1.bf16.msra.mxu0 %v278
    %317 = vmatprep.subr.bf16.mxu0 0
    %318 = vmatpush1.bf16.msra.mxu0 %v279
    %319 = vmatprep.subr.bf16.mxu0 0
    %320 = vmatpush1.bf16.msra.mxu0 %v280
    %321 = vmatprep.subr.bf16.mxu0 0
    %322 = vmatpush1.bf16.msra.mxu0 %v281
    %323 = vmatprep.subr.bf16.mxu0 0
    %324 = vmatpush1.bf16.msra.mxu0 %v282
    %325 = vmatprep.subr.bf16.mxu0 0
    %326 = vmatpush1.bf16.msra.mxu0 %v283
    %327 = vmatprep.subr.bf16.mxu0 0
    %328 = vmatpush1.bf16.msra.mxu0 %v284
    %329 = vmatprep.subr.bf16.mxu0 0
    %330 = vmatpush1.bf16.msra.mxu0 %v285
    %331 = vmatprep.subr.bf16.mxu0 0
    %332 = vmatpush1.bf16.msra.mxu0 %v286
    %333 = vmatprep.subr.bf16.mxu0 0
    %334 = vmatpush1.bf16.msra.mxu0 %v287
    %335 = vmatprep.subr.bf16.mxu0 0
    %336 = vmatpush1.bf16.msra.mxu0 %v288
    %337 = vmatprep.mubr.bf16.mxu0 %v169
    %338 = vmatmul.mubr.bf16.gmra.mrb[0].mxu0 %v168
    %v339 = vpop.f32.mrb[0].mxu0
    %v340 = vadd.f32 %v207, %v339
    %v341 = vpop.f32.mrb[0].mxu0
    %v342 = vpop.f32.mrb[0].mxu0
    %v343 = vadd.f32 %v207, %v342
    %v344 = vpop.f32.mrb[0].mxu0
    %345 = vdwg.mxu0
    %v346 = vmax.f32 %v340, 0.0
    %v347 = vmax.f32 %v343, 0.0
    %v348 = vpack.c.bf16 %v347, %v346
    %v349 = vld [vmem:[#allocation6] sm:$0xf]
    %v350 = vld [vmem:[#allocation6 + $0x4] sm:$0xf]
    %v351 = vld [vmem:[#allocation6 + $0x8] sm:$0xf]
    %v352 = vld [vmem:[#allocation6 + $0xc] sm:$0xf]
    %v353 = vld [vmem:[#allocation6 + $0x10] sm:$0xf]
    %v354 = vld [vmem:[#allocation6 + $0x14] sm:$0xf]
    %v355 = vld [vmem:[#allocation6 + $0x18] sm:$0xf]
    %v356 = vld [vmem:[#allocation6 + $0x1c] sm:$0xf]
    %v357 = vld [vmem:[#allocation6 + $0x20] sm:$0xf]
    %v358 = vld [vmem:[#allocation6 + $0x24] sm:$0xf]
    %v359 = vld [vmem:[#allocation6 + $0x28] sm:$0xf]
    %v360 = vld [vmem:[#allocation6 + $0x2c] sm:$0xf]
    %v361 = vld [vmem:[#allocation6 + $0x30] sm:$0xf]
    %v362 = vld [vmem:[#allocation6 + $0x34] sm:$0xf]
    %v363 = vld [vmem:[#allocation6 + $0x38] sm:$0xf]
    %v364 = vld [vmem:[#allocation6 + $0x3c] sm:$0xf]
    %v381 = vunpack.c.l.b16 %v349
    %v382 = vunpack.c.l.b16 %v350
    %v383 = vunpack.c.l.b16 %v351
    %v384 = vunpack.c.l.b16 %v352
    %v385 = vunpack.c.l.b16 %v353
    %v386 = vunpack.c.l.b16 %v354
    %v387 = vunpack.c.l.b16 %v355
    %v388 = vunpack.c.l.b16 %v356
    %v389 = vunpack.c.l.b16 %v357
    %v390 = vunpack.c.l.b16 %v358
    %v391 = vunpack.c.l.b16 %v359
    %v392 = vunpack.c.l.b16 %v360
    %v393 = vunpack.c.l.b16 %v361
    %v394 = vunpack.c.l.b16 %v362
    %v395 = vunpack.c.l.b16 %v363
    %v396 = vunpack.c.l.b16 %v364
    %v397 = vpack.c.b16 %v382, %v381
    %v398 = vpack.c.b16 %v384, %v383
    %v399 = vpack.c.b16 %v386, %v385
    %v400 = vpack.c.b16 %v388, %v387
    %v401 = vpack.c.b16 %v390, %v389
    %v402 = vpack.c.b16 %v392, %v391
    %v403 = vpack.c.b16 %v394, %v393
    %v404 = vpack.c.b16 %v396, %v395
    %413 = vmatprep.subr.bf16.mxu0 0
    %414 = vmatpush1.bf16.msra.mxu0 %v397
    %415 = vmatprep.subr.bf16.mxu0 0
    %416 = vmatpush1.bf16.msra.mxu0 %v398
    %417 = vmatprep.subr.bf16.mxu0 0
    %418 = vmatpush1.bf16.msra.mxu0 %v399
    %419 = vmatprep.subr.bf16.mxu0 0
    %420 = vmatpush1.bf16.msra.mxu0 %v400
    %421 = vmatprep.subr.bf16.mxu0 0
    %422 = vmatpush1.bf16.msra.mxu0 %v401
    %423 = vmatprep.subr.bf16.mxu0 0
    %424 = vmatpush1.bf16.msra.mxu0 %v402
    %425 = vmatprep.subr.bf16.mxu0 0
    %426 = vmatpush1.bf16.msra.mxu0 %v403
    %427 = vmatprep.subr.bf16.mxu0 0
    %428 = vmatpush1.bf16.msra.mxu0 %v404
    %429 = vmatprep.subr.bf16.mxu0 0
    %430 = vmatpush1.bf16.msra.mxu0 0
    %431 = vmatprep.subr.bf16.mxu0 0
    %432 = vmatpush1.bf16.msra.mxu0 0
    %433 = vmatprep.subr.bf16.mxu0 0
    %434 = vmatpush1.bf16.msra.mxu0 0
    %435 = vmatprep.subr.bf16.mxu0 0
    %436 = vmatpush1.bf16.msra.mxu0 0
    %437 = vmatprep.subr.bf16.mxu0 0
    %438 = vmatpush1.bf16.msra.mxu0 0
    %439 = vmatprep.subr.bf16.mxu0 0
    %440 = vmatpush1.bf16.msra.mxu0 0
    %441 = vmatprep.subr.bf16.mxu0 0
    %442 = vmatpush1.bf16.msra.mxu0 0
    %443 = vmatprep.subr.bf16.mxu0 0
    %444 = vmatpush1.bf16.msra.mxu0 0
    %445 = vmatprep.mubr.bf16.mxu0 0
    %446 = vmatmul.mubr.bf16.gmra.mrb[0].mxu0 %v348
    %v447 = vpop.f32.mrb[0].mxu0
    %v448 = vadd.f32 0.0, %v447
    %v449 = vpop.f32.mrb[0].mxu0
    %v450 = vpop.f32.mrb[0].mxu0
    %v451 = vadd.f32 0.0, %v450
    %v452 = vpop.f32.mrb[0].mxu0
    %453 = vdwg.mxu0
    %v454 = vld [vmem:[#allocation7] sm:$0x1]
    %v456 = vlaneseq
    %v457 = vshrl.u32 %v456, 7
    %v458 = vsub.s32 0, %v457
    %v459 = vrot.slane %v454, %v458
    %v461 = vadd.f32 %v448, %v459
    %v462 = vadd.f32 %v451, %v459
    %v463 = vxor.u32 %v461, 2147483648
    %v464 = vxor.u32 %v462, 2147483648
    %v465 = vmul.f32 %v463, 1.442695
    %v466 = vpow.pop %v465
    %v467 = vmul.f32 %v464, 1.442695
    %v468 = vpow.pop %v467
    %v469 = vadd.f32 %v466, 1.0
    %v470 = vadd.f32 %v468, 1.0
    %v471 = vrcp.pop %v469
    %v472 = vmul.f32 1.0, %v471
    %v473 = vrcp.pop %v470
    %v474 = vmul.f32 1.0, %v473
    %vm475 = vcmask 64512
    %476 = vst.msk [vmem:[%s7] sm:$0xff] %vm475, %v472
    %477 = vst.msk [vmem:[%s7 + $0x8] sm:$0xff] %vm475, %v474
    // Predicated region
    $region46: #{transaction_classifier_forward.1} parent=1 // pred_check
      _
    $region47: #{transaction_classifier_forward.1} parent=1 // pred_check_branch
      %479 = sbr.rel (0) target = $region49
    $region48: #{transaction_classifier_forward.1} parent=1 // pred_region
      _
    $region49: #{transaction_classifier_forward.1} parent=1 // pred_fallthru
      _
    // Predicated region
    $region50: #{transaction_classifier_forward.1} parent=1 // pred_check
      _
    $region51: #{transaction_classifier_forward.1} parent=1 // pred_check_branch
      %481 = sbr.rel (0) target = $region53
    $region52: #{transaction_classifier_forward.1} parent=1 // pred_region
      _
    $region53: #{transaction_classifier_forward.1} parent=1 // pred_fallthru
      _
    %482 = vsyncpa [#allocation3], 1
    %483 = vsyncpa [#allocation5], 1
    %484 = vsyncpa [#allocation8], 1

</llo_original>
